<compile_context>
chip_gen: v5e
topology: v5e:2x2
jax: 0.10.0
libtpu: 0.0.40
codegen_flags: <defaults>
</compile_context>

<pallas_src>
import functools

import numpy as np

import jax
import jax.numpy as jnp
from jax.experimental import pallas as pl
from jax.experimental.pallas import tpu as pltpu

BN_EPS = 1e-5


def _toeplitz_conv_weights(w_hwio, width):
    """Fold kx taps + width zero-padding of a 3x3 'same' conv into matmul operands.

    w_hwio: (3, 3, Cin, Cout).  Returns bw: (3, W*Cin, W*Cout) with
      bw[ky, iw*Cin+ci, ow*Cout+co] = w[ky, iw-ow+1, ci, co] if 0 <= iw-ow+1 < 3
                                      0                      otherwise
    so that out[row, ow*Cout+co] = sum_ky  x_row(row + ky - 1) @ bw[ky].
    """
    kh, kw, cin, cout = w_hwio.shape
    iw = np.arange(width)[:, None, None]
    ow = np.arange(width)[None, :, None]
    kx = np.arange(kw)[None, None, :]
    taps = (iw - ow + 1 == kx).astype(np.float32)          # (W, W, kw), 0/1
    big = jnp.einsum("iok,hkcd->hicod", jnp.asarray(taps), w_hwio)
    return big.reshape(kh, width * cin, width * cout)


def _double_conv_kernel(xp_ref, bw1_ref, bw2_ref, g1_ref, be1_ref,
                        g2_ref, be2_ref, csel_ref, cselT_ref, mask_ref,
                        o_ref, hpad_ref, *, inv_count):
    frame = xp_ref.shape[0]          # N*(H+2) stacked padded rows
    rows = o_ref.shape[0]            # frame - 2 computed rows
    wcmid = bw1_ref.shape[2]

    # hoisted once (review: don't re-broadcast inside loops)
    csel = csel_ref[...]             # (W*C, C)  0/1 channel-selection matrix
    cselT = cselT_ref[...]           # (C, W*C)
    mask = mask_ref[...]             # (rows, 1) 1.0 on real image rows, 0.0 on halo rows

    def conv3x3(src_ref, bw_ref):
        # 3 MXU matmuls; kx taps + W zero-padding live inside bw_ref.
        acc = jnp.dot(src_ref[0:rows, :], bw_ref[0],
                      preferred_element_type=jnp.float32)
        for ky in range(1, 3):
            acc = acc + jnp.dot(src_ref[ky:ky + rows, :], bw_ref[ky],
                                preferred_element_type=jnp.float32)
        return acc

    def bn_relu(y, g_ref, be_ref):
        # One fused stats sweep (sum & sum-of-squares), var = E[y^2] - mean^2.
        ym = y * mask
        col_s = jnp.sum(ym, axis=0, keepdims=True)                       # (1, W*C)
        col_ss = jnp.sum(ym * ym, axis=0, keepdims=True)                 # (1, W*C)
        s = jnp.dot(col_s, csel, preferred_element_type=jnp.float32)     # (1, C)
        ss = jnp.dot(col_ss, csel, preferred_element_type=jnp.float32)   # (1, C)
        mean = s * inv_count
        var = ss * inv_count - mean * mean
        scale = g_ref[...] * jax.lax.rsqrt(var + BN_EPS)                 # (1, C)
        shift = be_ref[...] - mean * scale                               # (1, C)
        lane_scale = jnp.dot(scale, cselT, preferred_element_type=jnp.float32)
        lane_shift = jnp.dot(shift, cselT, preferred_element_type=jnp.float32)
        # mask zeros the inter-image halo rows so they act as zero padding below
        return jnp.maximum(y * lane_scale + lane_shift, 0.0) * mask

    # ---- block 1: conv -> BN -> ReLU (conv bias cancelled by batch-stat BN) --
    h1 = bn_relu(conv3x3(xp_ref, bw1_ref), g1_ref, be1_ref)              # (rows, W*Cmid)

    # H-halo for the second conv: zero only the two outer halo rows, then one
    # bulk store of h1 (interior halo rows are already zero via `mask`).
    hpad_ref[0:1, :] = jnp.zeros((1, wcmid), jnp.float32)
    hpad_ref[frame - 1:frame, :] = jnp.zeros((1, wcmid), jnp.float32)
    hpad_ref[1:1 + rows, :] = h1

    # ---- block 2: conv -> BN -> ReLU -----------------------------------------
    h2 = bn_relu(conv3x3(hpad_ref, bw2_ref), g2_ref, be2_ref)            # (rows, W*Cout)
    o_ref[...] = h2.astype(o_ref.dtype)                                  # full-width store


def double_conv(x_nchw, params):
    """Forward pass of DoubleConv.  x_nchw: (N, Cin, H, W) float32."""
    w1, b1, g1, be1, w2, b2, g2, be2 = params
    del b1, b2   # exactly cancelled by the batch-stat BN mean subtraction
    n, cin, h, w = x_nchw.shape
    cmid, cout = w1.shape[-1], w2.shape[-1]
    assert cmid == cout, "DoubleConv uses out_channels for both convs"
    hp = h + 2
    frame = n * hp
    rows = frame - 2

    # --- layout plumbing (XLA): NCHW -> stacked H-padded rows, lanes = W*Cin --
    x_rows = jnp.transpose(x_nchw, (0, 2, 3, 1))                  # (N, H, W, Cin)
    x_rows = jnp.pad(x_rows, ((0, 0), (1, 1), (0, 0), (0, 0)))    # (N, H+2, W, Cin)
    x_rows = x_rows.reshape(frame, w * cin)                       # (N*(H+2), W*Cin)

    # --- conv weights as block-Toeplitz matmul operands ------------------------
    bw1 = _toeplitz_conv_weights(w1, w)                           # (3, W*Cin,  W*Cmid)
    bw2 = _toeplitz_conv_weights(w2, w)                           # (3, W*Cmid, W*Cout)

    # --- BN helpers: channel-selection matrix + row-validity mask --------------
    csel_np = np.tile(np.eye(cout, dtype=np.float32), (w, 1))     # (W*C, C)
    csel = jnp.asarray(csel_np)
    cselT = jnp.asarray(csel_np.T)                                # (C, W*C)

    p_row = np.arange(1, frame - 1)                               # stacked row ids
    valid = (p_row % hp >= 1) & (p_row % hp <= h)                 # real rows vs halo rows
    row_mask = jnp.asarray(valid.astype(np.float32).reshape(rows, 1))

    vmem = pl.BlockSpec(memory_space=pltpu.MemorySpace.VMEM)
    kernel = functools.partial(_double_conv_kernel,
                               inv_count=1.0 / float(n * h * w))
    out_rows = pl.pallas_call(
        kernel,
        out_shape=jax.ShapeDtypeStruct((rows, w * cout), jnp.float32),
        in_specs=[vmem] * 10,
        out_specs=vmem,
        scratch_shapes=[pltpu.VMEM((frame, w * cmid), jnp.float32)],
    )(x_rows, bw1, bw2, g1, be1, g2, be2, csel, cselT, row_mask)

    # --- unstack: rows -> (N, H, W, Cout) -> NCHW -------------------------------
    out_full = jnp.pad(out_rows, ((1, 1), (0, 0)))                # (frame, W*Cout)
    out = out_full.reshape(n, hp, w, cout)[:, 1:h + 1]            # drop halo rows
    return jnp.transpose(out, (0, 3, 1, 2))


def ref_forward(x, params):
    """Pure-JAX reference mimicking the PyTorch module (training-mode BN)."""
    w1, b1, g1, be1, w2, b2, g2, be2 = params

    def conv(xn, wgt, b):
        y = jax.lax.conv_general_dilated(
            xn, wgt, window_strides=(1, 1), padding="SAME",
            dimension_numbers=("NCHW", "HWIO", "NCHW"))
        return y + b.reshape(1, -1, 1, 1)

    def bn_relu(y, g, be):
        mean = jnp.mean(y, axis=(0, 2, 3), keepdims=True)
        var = jnp.mean((y - mean) ** 2, axis=(0, 2, 3), keepdims=True)
        yn = (y - mean) * jax.lax.rsqrt(var + BN_EPS)
        return jnp.maximum(yn * g.reshape(1, -1, 1, 1) + be.reshape(1, -1, 1, 1), 0.0)

    hmid = bn_relu(conv(x, w1, b1), g1, be1)
    return bn_relu(conv(hmid, w2, b2), g2, be2)


if __name__ == "__main__":
    N, Cin, H, W = 2, 4, 16, 16
    Cout = 8  # out_channels

    key = jax.random.PRNGKey(0)
    ks = jax.random.split(key, 9)
    x = jax.random.normal(ks[0], (N, Cin, H, W), jnp.float32)

    # Deterministic synthetic parameters (shapes from DoubleConv.__init__).
    # Conv weights stored HWIO; BN gamma/beta perturbed so the affine path is exercised.
    w1 = 0.2 * jax.random.normal(ks[1], (3, 3, Cin, Cout), jnp.float32)
    b1 = 0.1 * jax.random.normal(ks[2], (1, Cout), jnp.float32)
    g1 = 1.0 + 0.1 * jax.random.normal(ks[3], (1, Cout), jnp.float32)
    be1 = 0.1 * jax.random.normal(ks[4], (1, Cout), jnp.float32)
    w2 = 0.2 * jax.random.normal(ks[5], (3, 3, Cout, Cout), jnp.float32)
    b2 = 0.1 * jax.random.normal(ks[6], (1, Cout), jnp.float32)
    g2 = 1.0 + 0.1 * jax.random.normal(ks[7], (1, Cout), jnp.float32)
    be2 = 0.1 * jax.random.normal(ks[8], (1, Cout), jnp.float32)
    params = (w1, b1, g1, be1, w2, b2, g2, be2)

    out = double_conv(x, params)
    jax.block_until_ready(out)

    ref = ref_forward(x, params)
    assert out.shape == (N, Cout, H, W), out.shape
    # Tolerance budget: the in-kernel MXU matmul formulation and XLA's conv may
    # round differently (multi-pass f32-on-MXU, one-pass variance); genuine
    # layout / Toeplitz-indexing / BN bugs would show up as O(1) errors, far
    # above this threshold.
    assert jnp.allclose(out, ref, atol=2e-2, rtol=2e-2), \
        float(jnp.max(jnp.abs(out - ref)))
    print("KERNEL_OK")
</pallas_src>

<mosaic_0001>
module attributes {stable_mosaic.version = 11 : i64} {
  func.func @_double_conv_kernel(%arg0: memref<36x64xf32, #tpu.memory_space<vmem>>, %arg1: memref<3x64x128xf32, #tpu.memory_space<vmem>>, %arg2: memref<3x128x128xf32, #tpu.memory_space<vmem>>, %arg3: memref<1x8xf32, #tpu.memory_space<vmem>>, %arg4: memref<1x8xf32, #tpu.memory_space<vmem>>, %arg5: memref<1x8xf32, #tpu.memory_space<vmem>>, %arg6: memref<1x8xf32, #tpu.memory_space<vmem>>, %arg7: memref<128x8xf32, #tpu.memory_space<vmem>>, %arg8: memref<8x128xf32, #tpu.memory_space<vmem>>, %arg9: memref<34x1xf32, #tpu.memory_space<vmem>>, %arg10: memref<34x128xf32, #tpu.memory_space<vmem>>, %arg11: memref<36x128xf32, #tpu.memory_space<vmem>>) attributes {dimension_semantics = [], scalar_prefetch = 0 : i64, scratch_operands = 1 : i64, tpu.core_type = #tpu.core_type<tc>} {
    %c0 = arith.constant 0 : index
    %c0_0 = arith.constant 0 : index
    %0 = vector.load %arg7[%c0, %c0_0] : memref<128x8xf32, #tpu.memory_space<vmem>>, vector<128x8xf32>
    %c0_1 = arith.constant 0 : index
    %c0_2 = arith.constant 0 : index
    %1 = vector.load %arg8[%c0_1, %c0_2] : memref<8x128xf32, #tpu.memory_space<vmem>>, vector<8x128xf32>
    %c0_3 = arith.constant 0 : index
    %c0_4 = arith.constant 0 : index
    %2 = vector.load %arg9[%c0_3, %c0_4] : memref<34x1xf32, #tpu.memory_space<vmem>>, vector<34x1xf32>
    %c0_5 = arith.constant 0 : index
    %c0_6 = arith.constant 0 : index
    %3 = vector.load %arg0[%c0_5, %c0_6] : memref<36x64xf32, #tpu.memory_space<vmem>>, vector<34x64xf32>
    %c0_7 = arith.constant 0 : index
    %c0_8 = arith.constant 0 : index
    %c0_9 = arith.constant 0 : index
    %4 = vector.load %arg1[%c0_7, %c0_8, %c0_9] : memref<3x64x128xf32, #tpu.memory_space<vmem>>, vector<1x64x128xf32>
    %5 = vector.shape_cast %4 : vector<1x64x128xf32> to vector<64x128xf32>
    %cst = arith.constant dense<0.000000e+00> : vector<34x128xf32>
    %6 = tpu.matmul %3, %5, %cst {dimension_numbers = #tpu.dot_dimension_numbers<[1], [0], [0], [1], [0, 0, 1, 1], [], []>} : vector<34x64xf32>, vector<64x128xf32>, vector<34x128xf32> -> vector<34x128xf32>
    %c1 = arith.constant 1 : index
    %c0_10 = arith.constant 0 : index
    %7 = vector.load %arg0[%c1, %c0_10] : memref<36x64xf32, #tpu.memory_space<vmem>>, vector<34x64xf32>
    %c1_11 = arith.constant 1 : index
    %c0_12 = arith.constant 0 : index
    %c0_13 = arith.constant 0 : index
    %8 = vector.load %arg1[%c1_11, %c0_12, %c0_13] : memref<3x64x128xf32, #tpu.memory_space<vmem>>, vector<1x64x128xf32>
    %9 = vector.shape_cast %8 : vector<1x64x128xf32> to vector<64x128xf32>
    %cst_14 = arith.constant dense<0.000000e+00> : vector<34x128xf32>
    %10 = tpu.matmul %7, %9, %cst_14 {dimension_numbers = #tpu.dot_dimension_numbers<[1], [0], [0], [1], [0, 0, 1, 1], [], []>} : vector<34x64xf32>, vector<64x128xf32>, vector<34x128xf32> -> vector<34x128xf32>
    %11 = arith.addf %6, %10 : vector<34x128xf32>
    %c2 = arith.constant 2 : index
    %c0_15 = arith.constant 0 : index
    %12 = vector.load %arg0[%c2, %c0_15] : memref<36x64xf32, #tpu.memory_space<vmem>>, vector<34x64xf32>
    %c2_16 = arith.constant 2 : index
    %c0_17 = arith.constant 0 : index
    %c0_18 = arith.constant 0 : index
    %13 = vector.load %arg1[%c2_16, %c0_17, %c0_18] : memref<3x64x128xf32, #tpu.memory_space<vmem>>, vector<1x64x128xf32>
    %14 = vector.shape_cast %13 : vector<1x64x128xf32> to vector<64x128xf32>
    %cst_19 = arith.constant dense<0.000000e+00> : vector<34x128xf32>
    %15 = tpu.matmul %12, %14, %cst_19 {dimension_numbers = #tpu.dot_dimension_numbers<[1], [0], [0], [1], [0, 0, 1, 1], [], []>} : vector<34x64xf32>, vector<64x128xf32>, vector<34x128xf32> -> vector<34x128xf32>
    %16 = arith.addf %11, %15 : vector<34x128xf32>
    %17 = vector.broadcast %2 : vector<34x1xf32> to vector<34x128xf32>
    %18 = arith.mulf %16, %17 : vector<34x128xf32>
    %cst_20 = arith.constant dense<0.000000e+00> : vector<128xf32>
    %19 = vector.multi_reduction <add>, %18, %cst_20 [0] : vector<34x128xf32> to vector<128xf32>
    %20 = vector.shape_cast %19 : vector<128xf32> to vector<1x128xf32>
    %21 = arith.mulf %18, %18 : vector<34x128xf32>
    %cst_21 = arith.constant dense<0.000000e+00> : vector<128xf32>
    %22 = vector.multi_reduction <add>, %21, %cst_21 [0] : vector<34x128xf32> to vector<128xf32>
    %23 = vector.shape_cast %22 : vector<128xf32> to vector<1x128xf32>
    %cst_22 = arith.constant dense<0.000000e+00> : vector<1x8xf32>
    %24 = tpu.matmul %20, %0, %cst_22 {dimension_numbers = #tpu.dot_dimension_numbers<[1], [0], [0], [1], [0, 0, 1, 1], [], []>} : vector<1x128xf32>, vector<128x8xf32>, vector<1x8xf32> -> vector<1x8xf32>
    %cst_23 = arith.constant dense<0.000000e+00> : vector<1x8xf32>
    %25 = tpu.matmul %23, %0, %cst_23 {dimension_numbers = #tpu.dot_dimension_numbers<[1], [0], [0], [1], [0, 0, 1, 1], [], []>} : vector<1x128xf32>, vector<128x8xf32>, vector<1x8xf32> -> vector<1x8xf32>
    %cst_24 = arith.constant 0.001953125 : f32
    %26 = vector.broadcast %cst_24 : f32 to vector<1x8xf32>
    %27 = arith.mulf %24, %26 : vector<1x8xf32>
    %cst_25 = arith.constant 0.001953125 : f32
    %28 = vector.broadcast %cst_25 : f32 to vector<1x8xf32>
    %29 = arith.mulf %25, %28 : vector<1x8xf32>
    %30 = arith.mulf %27, %27 : vector<1x8xf32>
    %31 = arith.subf %29, %30 : vector<1x8xf32>
    %c0_26 = arith.constant 0 : index
    %c0_27 = arith.constant 0 : index
    %32 = vector.load %arg3[%c0_26, %c0_27] : memref<1x8xf32, #tpu.memory_space<vmem>>, vector<1x8xf32>
    %cst_28 = arith.constant 9.99999974E-6 : f32
    %33 = vector.broadcast %cst_28 : f32 to vector<1x8xf32>
    %34 = arith.addf %31, %33 : vector<1x8xf32>
    %35 = math.rsqrt %34 : vector<1x8xf32>
    %36 = arith.mulf %32, %35 : vector<1x8xf32>
    %c0_29 = arith.constant 0 : index
    %c0_30 = arith.constant 0 : index
    %37 = vector.load %arg4[%c0_29, %c0_30] : memref<1x8xf32, #tpu.memory_space<vmem>>, vector<1x8xf32>
    %38 = arith.mulf %27, %36 : vector<1x8xf32>
    %39 = arith.subf %37, %38 : vector<1x8xf32>
    %cst_31 = arith.constant dense<0.000000e+00> : vector<1x128xf32>
    %40 = tpu.matmul %36, %1, %cst_31 {dimension_numbers = #tpu.dot_dimension_numbers<[1], [0], [0], [1], [0, 0, 1, 1], [], []>} : vector<1x8xf32>, vector<8x128xf32>, vector<1x128xf32> -> vector<1x128xf32>
    %cst_32 = arith.constant dense<0.000000e+00> : vector<1x128xf32>
    %41 = tpu.matmul %39, %1, %cst_32 {dimension_numbers = #tpu.dot_dimension_numbers<[1], [0], [0], [1], [0, 0, 1, 1], [], []>} : vector<1x8xf32>, vector<8x128xf32>, vector<1x128xf32> -> vector<1x128xf32>
    %42 = vector.broadcast %40 : vector<1x128xf32> to vector<34x128xf32>
    %43 = arith.mulf %16, %42 : vector<34x128xf32>
    %44 = vector.broadcast %41 : vector<1x128xf32> to vector<34x128xf32>
    %45 = arith.addf %43, %44 : vector<34x128xf32>
    %cst_33 = arith.constant 0.000000e+00 : f32
    %46 = vector.broadcast %cst_33 : f32 to vector<34x128xf32>
    %47 = arith.maximumf %45, %46 : vector<34x128xf32>
    %48 = vector.broadcast %2 : vector<34x1xf32> to vector<34x128xf32>
    %49 = arith.mulf %47, %48 : vector<34x128xf32>
    %cst_34 = arith.constant 0.000000e+00 : f32
    %50 = vector.broadcast %cst_34 : f32 to vector<1x128xf32>
    %c0_35 = arith.constant 0 : index
    %c0_36 = arith.constant 0 : index
    %51 = vector.load %arg11[%c0_35, %c0_36] : memref<36x128xf32, #tpu.memory_space<vmem>>, vector<1x128xf32>
    tpu.vector_store %arg11[%c0_35, %c0_36], %50 {strides = array<i32>} : memref<36x128xf32, #tpu.memory_space<vmem>>, vector<1x128xf32>,
    %cst_37 = arith.constant 0.000000e+00 : f32
    %52 = vector.broadcast %cst_37 : f32 to vector<1x128xf32>
    %c35 = arith.constant 35 : index
    %c0_38 = arith.constant 0 : index
    %53 = vector.load %arg11[%c35, %c0_38] : memref<36x128xf32, #tpu.memory_space<vmem>>, vector<1x128xf32>
    tpu.vector_store %arg11[%c35, %c0_38], %52 {strides = array<i32>} : memref<36x128xf32, #tpu.memory_space<vmem>>, vector<1x128xf32>,
    %c1_39 = arith.constant 1 : index
    %c0_40 = arith.constant 0 : index
    %54 = vector.load %arg11[%c1_39, %c0_40] : memref<36x128xf32, #tpu.memory_space<vmem>>, vector<34x128xf32>
    tpu.vector_store %arg11[%c1_39, %c0_40], %49 {strides = array<i32>} : memref<36x128xf32, #tpu.memory_space<vmem>>, vector<34x128xf32>,
    %c0_41 = arith.constant 0 : index
    %c0_42 = arith.constant 0 : index
    %55 = vector.load %arg11[%c0_41, %c0_42] : memref<36x128xf32, #tpu.memory_space<vmem>>, vector<34x128xf32>
    %c0_43 = arith.constant 0 : index
    %c0_44 = arith.constant 0 : index
    %c0_45 = arith.constant 0 : index
    %56 = vector.load %arg2[%c0_43, %c0_44, %c0_45] : memref<3x128x128xf32, #tpu.memory_space<vmem>>, vector<1x128x128xf32>
    %57 = vector.shape_cast %56 : vector<1x128x128xf32> to vector<128x128xf32>
    %cst_46 = arith.constant dense<0.000000e+00> : vector<34x128xf32>
    %58 = tpu.matmul %55, %57, %cst_46 {dimension_numbers = #tpu.dot_dimension_numbers<[1], [0], [0], [1], [0, 0, 1, 1], [], []>} : vector<34x128xf32>, vector<128x128xf32>, vector<34x128xf32> -> vector<34x128xf32>
    %c1_47 = arith.constant 1 : index
    %c0_48 = arith.constant 0 : index
    %59 = vector.load %arg11[%c1_47, %c0_48] : memref<36x128xf32, #tpu.memory_space<vmem>>, vector<34x128xf32>
    %c1_49 = arith.constant 1 : index
    %c0_50 = arith.constant 0 : index
    %c0_51 = arith.constant 0 : index
    %60 = vector.load %arg2[%c1_49, %c0_50, %c0_51] : memref<3x128x128xf32, #tpu.memory_space<vmem>>, vector<1x128x128xf32>
    %61 = vector.shape_cast %60 : vector<1x128x128xf32> to vector<128x128xf32>
    %cst_52 = arith.constant dense<0.000000e+00> : vector<34x128xf32>
    %62 = tpu.matmul %59, %61, %cst_52 {dimension_numbers = #tpu.dot_dimension_numbers<[1], [0], [0], [1], [0, 0, 1, 1], [], []>} : vector<34x128xf32>, vector<128x128xf32>, vector<34x128xf32> -> vector<34x128xf32>
    %63 = arith.addf %58, %62 : vector<34x128xf32>
    %c2_53 = arith.constant 2 : index
    %c0_54 = arith.constant 0 : index
    %64 = vector.load %arg11[%c2_53, %c0_54] : memref<36x128xf32, #tpu.memory_space<vmem>>, vector<34x128xf32>
    %c2_55 = arith.constant 2 : index
    %c0_56 = arith.constant 0 : index
    %c0_57 = arith.constant 0 : index
    %65 = vector.load %arg2[%c2_55, %c0_56, %c0_57] : memref<3x128x128xf32, #tpu.memory_space<vmem>>, vector<1x128x128xf32>
    %66 = vector.shape_cast %65 : vector<1x128x128xf32> to vector<128x128xf32>
    %cst_58 = arith.constant dense<0.000000e+00> : vector<34x128xf32>
    %67 = tpu.matmul %64, %66, %cst_58 {dimension_numbers = #tpu.dot_dimension_numbers<[1], [0], [0], [1], [0, 0, 1, 1], [], []>} : vector<34x128xf32>, vector<128x128xf32>, vector<34x128xf32> -> vector<34x128xf32>
    %68 = arith.addf %63, %67 : vector<34x128xf32>
    %69 = vector.broadcast %2 : vector<34x1xf32> to vector<34x128xf32>
    %70 = arith.mulf %68, %69 : vector<34x128xf32>
    %cst_59 = arith.constant dense<0.000000e+00> : vector<128xf32>
    %71 = vector.multi_reduction <add>, %70, %cst_59 [0] : vector<34x128xf32> to vector<128xf32>
    %72 = vector.shape_cast %71 : vector<128xf32> to vector<1x128xf32>
    %73 = arith.mulf %70, %70 : vector<34x128xf32>
    %cst_60 = arith.constant dense<0.000000e+00> : vector<128xf32>
    %74 = vector.multi_reduction <add>, %73, %cst_60 [0] : vector<34x128xf32> to vector<128xf32>
    %75 = vector.shape_cast %74 : vector<128xf32> to vector<1x128xf32>
    %cst_61 = arith.constant dense<0.000000e+00> : vector<1x8xf32>
    %76 = tpu.matmul %72, %0, %cst_61 {dimension_numbers = #tpu.dot_dimension_numbers<[1], [0], [0], [1], [0, 0, 1, 1], [], []>} : vector<1x128xf32>, vector<128x8xf32>, vector<1x8xf32> -> vector<1x8xf32>
    %cst_62 = arith.constant dense<0.000000e+00> : vector<1x8xf32>
    %77 = tpu.matmul %75, %0, %cst_62 {dimension_numbers = #tpu.dot_dimension_numbers<[1], [0], [0], [1], [0, 0, 1, 1], [], []>} : vector<1x128xf32>, vector<128x8xf32>, vector<1x8xf32> -> vector<1x8xf32>
    %cst_63 = arith.constant 0.001953125 : f32
    %78 = vector.broadcast %cst_63 : f32 to vector<1x8xf32>
    %79 = arith.mulf %76, %78 : vector<1x8xf32>
    %cst_64 = arith.constant 0.001953125 : f32
    %80 = vector.broadcast %cst_64 : f32 to vector<1x8xf32>
    %81 = arith.mulf %77, %80 : vector<1x8xf32>
    %82 = arith.mulf %79, %79 : vector<1x8xf32>
    %83 = arith.subf %81, %82 : vector<1x8xf32>
    %c0_65 = arith.constant 0 : index
    %c0_66 = arith.constant 0 : index
    %84 = vector.load %arg5[%c0_65, %c0_66] : memref<1x8xf32, #tpu.memory_space<vmem>>, vector<1x8xf32>
    %cst_67 = arith.constant 9.99999974E-6 : f32
    %85 = vector.broadcast %cst_67 : f32 to vector<1x8xf32>
    %86 = arith.addf %83, %85 : vector<1x8xf32>
    %87 = math.rsqrt %86 : vector<1x8xf32>
    %88 = arith.mulf %84, %87 : vector<1x8xf32>
    %c0_68 = arith.constant 0 : index
    %c0_69 = arith.constant 0 : index
    %89 = vector.load %arg6[%c0_68, %c0_69] : memref<1x8xf32, #tpu.memory_space<vmem>>, vector<1x8xf32>
    %90 = arith.mulf %79, %88 : vector<1x8xf32>
    %91 = arith.subf %89, %90 : vector<1x8xf32>
    %cst_70 = arith.constant dense<0.000000e+00> : vector<1x128xf32>
    %92 = tpu.matmul %88, %1, %cst_70 {dimension_numbers = #tpu.dot_dimension_numbers<[1], [0], [0], [1], [0, 0, 1, 1], [], []>} : vector<1x8xf32>, vector<8x128xf32>, vector<1x128xf32> -> vector<1x128xf32>
    %cst_71 = arith.constant dense<0.000000e+00> : vector<1x128xf32>
    %93 = tpu.matmul %91, %1, %cst_71 {dimension_numbers = #tpu.dot_dimension_numbers<[1], [0], [0], [1], [0, 0, 1, 1], [], []>} : vector<1x8xf32>, vector<8x128xf32>, vector<1x128xf32> -> vector<1x128xf32>
    %94 = vector.broadcast %92 : vector<1x128xf32> to vector<34x128xf32>
    %95 = arith.mulf %68, %94 : vector<34x128xf32>
    %96 = vector.broadcast %93 : vector<1x128xf32> to vector<34x128xf32>
    %97 = arith.addf %95, %96 : vector<34x128xf32>
    %cst_72 = arith.constant 0.000000e+00 : f32
    %98 = vector.broadcast %cst_72 : f32 to vector<34x128xf32>
    %99 = arith.maximumf %97, %98 : vector<34x128xf32>
    %100 = vector.broadcast %2 : vector<34x1xf32> to vector<34x128xf32>
    %101 = arith.mulf %99, %100 : vector<34x128xf32>
    %c0_73 = arith.constant 0 : index
    %c0_74 = arith.constant 0 : index
    %102 = vector.load %arg10[%c0_73, %c0_74] : memref<34x128xf32, #tpu.memory_space<vmem>>, vector<34x128xf32>
    tpu.vector_store %arg10[%c0_73, %c0_74], %101 {strides = array<i32>} : memref<34x128xf32, #tpu.memory_space<vmem>>, vector<34x128xf32>,
    return
  }
}

</mosaic_0001>

<llo_original>
// kernel: tpu_custom_call.1
$region0: #{tpu_custom_call.1}
  #allocation0 [shape = 'u32[]', space=smem, size = 0x4, offset = 0x4, fixed_abs, tag = 'smem constant byte address 0x4 - core index']
  #allocation1 [shape = 'u32[72,128]{1,0:T(1,128)}', space=vmem, size = 0x9000, scoped, tag = 'internal scratch']
  #allocation2 [shape = 'f32[36,128]{1,0:T(8,128)}', space=vmem, size = 0x5000, scoped, tag = 'scratch operand']
  %s0 = inlined_call_operand.vmem [shape: f32[36,64], index: 0, kind: input, shape index: {}]
  %s1 = inlined_call_operand.hbm [shape: f32[3,64,128], index: 1, kind: input, shape index: {}]
  %s2 = inlined_call_operand.hbm [shape: f32[3,128,128], index: 2, kind: input, shape index: {}]
  %s3 = inlined_call_operand.vmem [shape: f32[1,8], index: 3, kind: input, shape index: {}]
  %s4 = inlined_call_operand.vmem [shape: f32[1,8], index: 4, kind: input, shape index: {}]
  %s5 = inlined_call_operand.vmem [shape: f32[1,8], index: 5, kind: input, shape index: {}]
  %s6 = inlined_call_operand.vmem [shape: f32[1,8], index: 6, kind: input, shape index: {}]
  %s7 = inlined_call_operand.vmem [shape: f32[128,8], index: 7, kind: input, shape index: {}]
  %s8 = inlined_call_operand.vmem [shape: f32[8,128], index: 8, kind: input, shape index: {}]
  %s9 = inlined_call_operand.vmem [shape: f32[34,1], index: 9, kind: input, shape index: {}]
  %s10 = inlined_call_operand.hbm [shape: f32[34,128], index: 10, kind: output, shape index: {}]
  %s11 = sld [smem:[#allocation0]]
  $region58: #{tpu_custom_call.1} parent=0
    _
  %s13 = ssub.s32 1, %s11
  %s14 = scalar_select 0, %s13, %s11
  $region1: #{tpu_custom_call.1} parent=0
    #allocation3 [shape = 'u8[98304]{0}', space=vmem, size = 0x18000, scoped, tag = 'input window, operand 1, single buffered']
    #allocation4 [shape = 's32[1]{0}', space=sflag, size = 0x4, scoped, tag = 'scoped memory for tpu_custom_call.1']
    #allocation5 [shape = 's32[1]{0}', space=sflag, size = 0x4, scoped, tag = 'scoped memory for tpu_custom_call.1']
    #allocation6 [shape = 'u8[196608]{0}', space=vmem, size = 0x30000, scoped, tag = 'input window, operand 2, single buffered']
    #allocation7 [shape = 's32[1]{0}', space=sflag, size = 0x4, scoped, tag = 'scoped memory for tpu_custom_call.1']
    #allocation8 [shape = 'u8[20480]{0}', space=vmem, size = 0x5000, scoped, tag = 'output window, operand 0, single buffered']
    %15 = vsyncpa [#allocation4], 0
    %16 = vsyncpa [#allocation7], 0
    %17 = vsyncpa [#allocation5], 0
    // Predicated region
    $region2: #{tpu_custom_call.1} parent=1 // pred_check
      _
    $region3: #{tpu_custom_call.1} parent=1 // pred_check_branch
      %19 = sbr.rel (0) target = $region5
    $region4: #{tpu_custom_call.1} parent=1 // pred_region
      _
    $region5: #{tpu_custom_call.1} parent=1 // pred_fallthru
      _
    // Predicated region
    $region6: #{tpu_custom_call.1} parent=1 // pred_check
      _
    $region7: #{tpu_custom_call.1} parent=1 // pred_check_branch
      %21 = sbr.rel (0) target = $region9
    $region8: #{tpu_custom_call.1} parent=1 // pred_region
      %23 = vsyncadd [#allocation4], 0
      %s24 = sshll.u32 %s1, 4
      %s25 = int_to_ptr.hbm [resolvable:$true] %s24
      %s26 = sshll.u32 [#allocation3], 4
      %s27 = int_to_ptr.vmem [resolvable:$true] %s26
      %32 = dma.hbm_to_vmem [thread:$0]  %s25, 3072, %s27, [#allocation4], 128, 128, 8
    $region9: #{tpu_custom_call.1} parent=1 // pred_fallthru
      _
    // Predicated region
    $region10: #{tpu_custom_call.1} parent=1 // pred_check
      _
    $region11: #{tpu_custom_call.1} parent=1 // pred_check_branch
      %34 = sbr.rel (0) target = $region13
    $region12: #{tpu_custom_call.1} parent=1 // pred_region
      %36 = vsyncadd [#allocation7], 0
      %s37 = sshll.u32 %s2, 4
      %s38 = int_to_ptr.hbm [resolvable:$true] %s37
      %s39 = sshll.u32 [#allocation6], 4
      %s40 = int_to_ptr.vmem [resolvable:$true] %s39
      %45 = dma.hbm_to_vmem [thread:$0]  %s38, 6144, %s40, [#allocation7], 128, 128, 8
    $region13: #{tpu_custom_call.1} parent=1 // pred_fallthru
      _
    // Predicated region
    $region14: #{tpu_custom_call.1} parent=1 // pred_check
      _
    $region15: #{tpu_custom_call.1} parent=1 // pred_check_branch
      %47 = sbr.rel (0) target = $region17
    $region16: #{tpu_custom_call.1} parent=1 // pred_region
      _
    $region17: #{tpu_custom_call.1} parent=1 // pred_fallthru
      _
    // Predicated region
    $region18: #{tpu_custom_call.1} parent=1 // pred_check
      _
    $region19: #{tpu_custom_call.1} parent=1 // pred_check_branch
      %49 = sbr.rel (0) target = $region21
    $region20: #{tpu_custom_call.1} parent=1 // pred_region
      _
    $region21: #{tpu_custom_call.1} parent=1 // pred_fallthru
      _
    // Predicated region
    $region22: #{tpu_custom_call.1} parent=1 // pred_check
      _
    $region23: #{tpu_custom_call.1} parent=1 // pred_check_branch
      %51 = sbr.rel (0) target = $region25
    $region24: #{tpu_custom_call.1} parent=1 // pred_region
      _
    $region25: #{tpu_custom_call.1} parent=1 // pred_fallthru
      _
    // Predicated region
    $region26: #{tpu_custom_call.1} parent=1 // pred_check
      _
    $region27: #{tpu_custom_call.1} parent=1 // pred_check_branch
      %53 = sbr.rel (0) target = $region29
    $region28: #{tpu_custom_call.1} parent=1 // pred_region
      _
    $region29: #{tpu_custom_call.1} parent=1 // pred_fallthru
      _
    // Predicated region
    $region30: #{tpu_custom_call.1} parent=1 // pred_check
      _
    $region31: #{tpu_custom_call.1} parent=1 // pred_check_branch
      %55 = sbr.rel (0) target = $region33
    $region32: #{tpu_custom_call.1} parent=1 // pred_region
      _
    $region33: #{tpu_custom_call.1} parent=1 // pred_fallthru
      _
    // Predicated region
    $region34: #{tpu_custom_call.1} parent=1 // pred_check
      _
    $region35: #{tpu_custom_call.1} parent=1 // pred_check_branch
      %57 = sbr.rel (0) target = $region37
    $region36: #{tpu_custom_call.1} parent=1 // pred_region
      _
    $region37: #{tpu_custom_call.1} parent=1 // pred_fallthru
      _
    // Predicated region
    $region38: #{tpu_custom_call.1} parent=1 // pred_check
      _
    $region39: #{tpu_custom_call.1} parent=1 // pred_check_branch
      %59 = sbr.rel (0) target = $region41
    $region40: #{tpu_custom_call.1} parent=1 // pred_region
      _
    $region41: #{tpu_custom_call.1} parent=1 // pred_fallthru
      _
    // Predicated region
    $region42: #{tpu_custom_call.1} parent=1 // pred_check
      _
    $region43: #{tpu_custom_call.1} parent=1 // pred_check_branch
      %61 = sbr.rel (0) target = $region45
    $region44: #{tpu_custom_call.1} parent=1 // pred_region
      %63 = dma.done [#allocation4], 3072
    $region45: #{tpu_custom_call.1} parent=1 // pred_fallthru
      _
    // Predicated region
    $region46: #{tpu_custom_call.1} parent=1 // pred_check
      _
    $region47: #{tpu_custom_call.1} parent=1 // pred_check_branch
      %65 = sbr.rel (0) target = $region49
    $region48: #{tpu_custom_call.1} parent=1 // pred_region
      %67 = dma.done [#allocation7], 6144
    $region49: #{tpu_custom_call.1} parent=1 // pred_fallthru
      _
    %v68 = vld [vmem:[%s7] sm:$0xff]
    %v69 = vld [vmem:[%s7 + $0x8] sm:$0xff]
    %v70 = vld [vmem:[%s7 + $0x10] sm:$0xff]
    %v71 = vld [vmem:[%s7 + $0x18] sm:$0xff]
    %v72 = vld [vmem:[%s7 + $0x20] sm:$0xff]
    %v73 = vld [vmem:[%s7 + $0x28] sm:$0xff]
    %v74 = vld [vmem:[%s7 + $0x30] sm:$0xff]
    %v75 = vld [vmem:[%s7 + $0x38] sm:$0xff]
    %v76 = vld [vmem:[%s7 + $0x40] sm:$0xff]
    %v77 = vld [vmem:[%s7 + $0x48] sm:$0xff]
    %v78 = vld [vmem:[%s7 + $0x50] sm:$0xff]
    %v79 = vld [vmem:[%s7 + $0x58] sm:$0xff]
    %v80 = vld [vmem:[%s7 + $0x60] sm:$0xff]
    %v81 = vld [vmem:[%s7 + $0x68] sm:$0xff]
    %v82 = vld [vmem:[%s7 + $0x70] sm:$0xff]
    %v83 = vld [vmem:[%s7 + $0x78] sm:$0xff]
    %v84 = vld [vmem:[%s8] sm:$0xff]
    %v85 = vld [vmem:[%s9] sm:$0xff]
    %v86 = vld [vmem:[%s9 + $0x8] sm:$0xff]
    %v87 = vld [vmem:[%s9 + $0x10] sm:$0xff]
    %v88 = vld [vmem:[%s9 + $0x18] sm:$0xff]
    %v89 = vld [vmem:[%s9 + $0x20] sm:$0x3]
    %v90 = vld [vmem:[%s0] sm:$0xff]
    %v91 = vld [vmem:[%s0 + $0x8] sm:$0xff]
    %v92 = vld [vmem:[%s0 + $0x10] sm:$0xff]
    %v93 = vld [vmem:[%s0 + $0x18] sm:$0xff]
    %v94 = vld [vmem:[%s0 + $0x20] sm:$0x3]
    %v95 = vld [vmem:[#allocation3] sm:$0xff]
    %v96 = vld [vmem:[#allocation3 + $0x8] sm:$0xff]
    %v97 = vld [vmem:[#allocation3 + $0x10] sm:$0xff]
    %v98 = vld [vmem:[#allocation3 + $0x18] sm:$0xff]
    %v99 = vld [vmem:[#allocation3 + $0x20] sm:$0xff]
    %v100 = vld [vmem:[#allocation3 + $0x28] sm:$0xff]
    %v101 = vld [vmem:[#allocation3 + $0x30] sm:$0xff]
    %v102 = vld [vmem:[#allocation3 + $0x38] sm:$0xff]
    %v103 = vld [vmem:[%s0 + $0x1] sm:$0xff]
    %v104 = vld [vmem:[%s0 + $0x9] sm:$0xff]
    %v105 = vld [vmem:[%s0 + $0x11] sm:$0xff]
    %v106 = vld [vmem:[%s0 + $0x19] sm:$0xff]
    %v107 = vld [vmem:[%s0 + $0x21] sm:$0x3]
    %s108 = scalar_lea.vmem [#allocation3], 64
    %v109 = vld [vmem:[%s108] sm:$0xff]
    %v110 = vld [vmem:[%s108 + $0x8] sm:$0xff]
    %v111 = vld [vmem:[%s108 + $0x10] sm:$0xff]
    %v112 = vld [vmem:[%s108 + $0x18] sm:$0xff]
    %v113 = vld [vmem:[%s108 + $0x20] sm:$0xff]
    %v114 = vld [vmem:[%s108 + $0x28] sm:$0xff]
    %v115 = vld [vmem:[%s108 + $0x30] sm:$0xff]
    %v116 = vld [vmem:[%s108 + $0x38] sm:$0xff]
    %vm117 = vcmask 523264
    %v119 = vsel %vm117, %v103, 0
    %v122 = vsel %vm117, %v104, 0
    %v125 = vsel %vm117, %v105, 0
    %v128 = vsel %vm117, %v106, 0
    %v131 = vsel %vm117, %v107, 0
    %133 = vmatpush.msra.mxu0 0.0
    %134 = vmatpush.msra.mxu0 0.0
    %135 = vmatpush.msra.mxu0 0.0
    %136 = vmatpush.msra.mxu0 0.0
    %137 = vmatpush.msra.mxu0 0.0
    %138 = vmatpush.msra.mxu0 0.0
    %139 = vmatpush.msra.mxu0 0.0
    %140 = vmatpush.msra.mxu0 0.0
    %141 = vmatpush.msra.mxu0 %v116
    %142 = vmatpush.msra.mxu0 %v115
    %143 = vmatpush.msra.mxu0 %v114
    %144 = vmatpush.msra.mxu0 %v113
    %145 = vmatpush.msra.mxu0 %v112
    %146 = vmatpush.msra.mxu0 %v111
    %147 = vmatpush.msra.mxu0 %v110
    %148 = vmatpush.msra.mxu0 %v109
    %149 = vmatmul.f32.gmra.mxu0 %v119
    %v150 = vpop.f32.mrf.mxu0
    %v151 = vadd.f32 0.0, %v150
    %152 = vmatmul.f32.gmra.mxu0 %v122
    %v153 = vpop.f32.mrf.mxu0
    %v154 = vadd.f32 0.0, %v153
    %155 = vmatmul.f32.gmra.mxu0 %v125
    %v156 = vpop.f32.mrf.mxu0
    %v157 = vadd.f32 0.0, %v156
    %158 = vmatmul.f32.gmra.mxu0 %v128
    %v159 = vpop.f32.mrf.mxu0
    %v160 = vadd.f32 0.0, %v159
    %161 = vmatmul.f32.gmra.mxu0 %v131
    %v162 = vpop.f32.mrf.mxu0
    %v163 = vadd.f32 0.0, %v162
    %164 = vdwg.mxu0
    %v166 = vsel %vm117, %v90, 0
    %v169 = vsel %vm117, %v91, 0
    %v172 = vsel %vm117, %v92, 0
    %v175 = vsel %vm117, %v93, 0
    %v178 = vsel %vm117, %v94, 0
    %180 = vmatpush.msra.mxu0 0.0
    %181 = vmatpush.msra.mxu0 0.0
    %182 = vmatpush.msra.mxu0 0.0
    %183 = vmatpush.msra.mxu0 0.0
    %184 = vmatpush.msra.mxu0 0.0
    %185 = vmatpush.msra.mxu0 0.0
    %186 = vmatpush.msra.mxu0 0.0
    %187 = vmatpush.msra.mxu0 0.0
    %188 = vmatpush.msra.mxu0 %v102
    %189 = vmatpush.msra.mxu0 %v101
    %190 = vmatpush.msra.mxu0 %v100
    %191 = vmatpush.msra.mxu0 %v99
    %192 = vmatpush.msra.mxu0 %v98
    %193 = vmatpush.msra.mxu0 %v97
    %194 = vmatpush.msra.mxu0 %v96
    %195 = vmatpush.msra.mxu0 %v95
    %196 = vmatmul.f32.gmra.mxu0 %v166
    %v197 = vpop.f32.mrf.mxu0
    %v198 = vadd.f32 %v151, %v197
    %199 = vmatmul.f32.gmra.mxu0 %v169
    %v200 = vpop.f32.mrf.mxu0
    %v201 = vadd.f32 %v154, %v200
    %202 = vmatmul.f32.gmra.mxu0 %v172
    %v203 = vpop.f32.mrf.mxu0
    %v204 = vadd.f32 %v157, %v203
    %205 = vmatmul.f32.gmra.mxu0 %v175
    %v206 = vpop.f32.mrf.mxu0
    %v207 = vadd.f32 %v160, %v206
    %208 = vmatmul.f32.gmra.mxu0 %v178
    %v209 = vpop.f32.mrf.mxu0
    %v210 = vadd.f32 %v163, %v209
    %211 = vdwg.mxu0
    %v212 = vld [vmem:[%s0 + $0x2] sm:$0xff]
    %v213 = vld [vmem:[%s0 + $0xa] sm:$0xff]
    %v214 = vld [vmem:[%s0 + $0x12] sm:$0xff]
    %v215 = vld [vmem:[%s0 + $0x1a] sm:$0xff]
    %v216 = vld [vmem:[%s0 + $0x22] sm:$0x3]
    %s217 = scalar_lea.vmem [#allocation3], 128
    %v218 = vld [vmem:[%s217] sm:$0xff]
    %v219 = vld [vmem:[%s217 + $0x8] sm:$0xff]
    %v220 = vld [vmem:[%s217 + $0x10] sm:$0xff]
    %v221 = vld [vmem:[%s217 + $0x18] sm:$0xff]
    %v222 = vld [vmem:[%s217 + $0x20] sm:$0xff]
    %v223 = vld [vmem:[%s217 + $0x28] sm:$0xff]
    %v224 = vld [vmem:[%s217 + $0x30] sm:$0xff]
    %v225 = vld [vmem:[%s217 + $0x38] sm:$0xff]
    %v227 = vsel %vm117, %v212, 0
    %v230 = vsel %vm117, %v213, 0
    %v233 = vsel %vm117, %v214, 0
    %v236 = vsel %vm117, %v215, 0
    %v239 = vsel %vm117, %v216, 0
    %241 = vmatpush.msra.mxu0 0.0
    %242 = vmatpush.msra.mxu0 0.0
    %243 = vmatpush.msra.mxu0 0.0
    %244 = vmatpush.msra.mxu0 0.0
    %245 = vmatpush.msra.mxu0 0.0
    %246 = vmatpush.msra.mxu0 0.0
    %247 = vmatpush.msra.mxu0 0.0
    %248 = vmatpush.msra.mxu0 0.0
    %249 = vmatpush.msra.mxu0 %v225
    %250 = vmatpush.msra.mxu0 %v224
    %251 = vmatpush.msra.mxu0 %v223
    %252 = vmatpush.msra.mxu0 %v222
    %253 = vmatpush.msra.mxu0 %v221
    %254 = vmatpush.msra.mxu0 %v220
    %255 = vmatpush.msra.mxu0 %v219
    %256 = vmatpush.msra.mxu0 %v218
    %257 = vmatmul.f32.gmra.mxu0 %v227
    %v258 = vpop.f32.mrf.mxu0
    %v259 = vadd.f32 0.0, %v258
    %260 = vmatmul.f32.gmra.mxu0 %v230
    %v261 = vpop.f32.mrf.mxu0
    %v262 = vadd.f32 0.0, %v261
    %263 = vmatmul.f32.gmra.mxu0 %v233
    %v264 = vpop.f32.mrf.mxu0
    %v265 = vadd.f32 0.0, %v264
    %266 = vmatmul.f32.gmra.mxu0 %v236
    %v267 = vpop.f32.mrf.mxu0
    %v268 = vadd.f32 0.0, %v267
    %269 = vmatmul.f32.gmra.mxu0 %v239
    %v270 = vpop.f32.mrf.mxu0
    %v271 = vadd.f32 0.0, %v270
    %272 = vdwg.mxu0
    %v273 = vadd.f32 %v198, %v259
    %v274 = vadd.f32 %v201, %v262
    %v275 = vadd.f32 %v204, %v265
    %v276 = vadd.f32 %v207, %v268
    %v277 = vadd.f32 %v210, %v271
    %279 = vset.pattern.permute.xlu0 0
    %280 = vperm.xlu0 %279, %v85
    %v281 = vpop.permute.xlu0 %280
    %284 = vset.pattern.permute.xlu0 0
    %285 = vperm.xlu0 %284, %v86
    %v286 = vpop.permute.xlu0 %285
    %289 = vset.pattern.permute.xlu0 0
    %290 = vperm.xlu0 %289, %v87
    %v291 = vpop.permute.xlu0 %290
    %294 = vset.pattern.permute.xlu0 0
    %295 = vperm.xlu0 %294, %v88
    %v296 = vpop.permute.xlu0 %295
    %299 = vset.pattern.permute.xlu0 0
    %300 = vperm.xlu0 %299, %v89
    %v301 = vpop.permute.xlu0 %300
    %v303 = vmul.f32 %v273, %v281
    %v304 = vmul.f32 %v274, %v286
    %v305 = vmul.f32 %v275, %v291
    %v306 = vmul.f32 %v276, %v296
    %v307 = vmul.f32 %v277, %v301
    %v308 = vadd.f32 %v303, %v304
    %v309 = vadd.f32 %v308, %v305
    %v310 = vadd.f32 %v309, %v306
    %vm311 = vcmask 1041408
    %v312 = vsel %vm311, %v307, 0.0
    %v313 = vadd.f32 %v310, %v312
    %v314 = vrot.slane %v313, 4
    %v315 = vadd.f32 %v313, %v314
    %v316 = vrot.slane %v315, 2
    %v317 = vadd.f32 %v315, %v316
    %v318 = vrot.slane %v317, 1
    %v319 = vadd.f32 %v317, %v318
    %v320 = vmul.f32 %v303, %v303
    %v321 = vmul.f32 %v304, %v304
    %v322 = vmul.f32 %v305, %v305
    %v323 = vmul.f32 %v306, %v306
    %v324 = vmul.f32 %v307, %v307
    %v325 = vadd.f32 %v320, %v321
    %v326 = vadd.f32 %v325, %v322
    %v327 = vadd.f32 %v326, %v323
    %v328 = vsel %vm311, %v324, 0.0
    %v329 = vadd.f32 %v327, %v328
    %v330 = vrot.slane %v329, 4
    %v331 = vadd.f32 %v329, %v330
    %v332 = vrot.slane %v331, 2
    %v333 = vadd.f32 %v331, %v332
    %v334 = vrot.slane %v333, 1
    %v335 = vadd.f32 %v333, %v334
    %336 = vmatpush.msra.mxu0 %v83
    %337 = vmatpush.msra.mxu0 %v82
    %338 = vmatpush.msra.mxu0 %v81
    %339 = vmatpush.msra.mxu0 %v80
    %340 = vmatpush.msra.mxu0 %v79
    %341 = vmatpush.msra.mxu0 %v78
    %342 = vmatpush.msra.mxu0 %v77
    %343 = vmatpush.msra.mxu0 %v76
    %344 = vmatpush.msra.mxu0 %v75
    %345 = vmatpush.msra.mxu0 %v74
    %346 = vmatpush.msra.mxu0 %v73
    %347 = vmatpush.msra.mxu0 %v72
    %348 = vmatpush.msra.mxu0 %v71
    %349 = vmatpush.msra.mxu0 %v70
    %350 = vmatpush.msra.mxu0 %v69
    %351 = vmatpush.msra.mxu0 %v68
    %352 = vmatmul.f32.gmra.mxu0 %v319
    %v353 = vpop.f32.mrf.mxu0
    %v354 = vadd.f32 0.0, %v353
    %355 = vdwg.mxu0
    %356 = vmatpush.msra.mxu0 %v83
    %357 = vmatpush.msra.mxu0 %v82
    %358 = vmatpush.msra.mxu0 %v81
    %359 = vmatpush.msra.mxu0 %v80
    %360 = vmatpush.msra.mxu0 %v79
    %361 = vmatpush.msra.mxu0 %v78
    %362 = vmatpush.msra.mxu0 %v77
    %363 = vmatpush.msra.mxu0 %v76
    %364 = vmatpush.msra.mxu0 %v75
    %365 = vmatpush.msra.mxu0 %v74
    %366 = vmatpush.msra.mxu0 %v73
    %367 = vmatpush.msra.mxu0 %v72
    %368 = vmatpush.msra.mxu0 %v71
    %369 = vmatpush.msra.mxu0 %v70
    %370 = vmatpush.msra.mxu0 %v69
    %371 = vmatpush.msra.mxu0 %v68
    %372 = vmatmul.f32.gmra.mxu0 %v335
    %v373 = vpop.f32.mrf.mxu0
    %v374 = vadd.f32 0.0, %v373
    %375 = vdwg.mxu0
    %v376 = vmul.f32 %v354, 0.001953125
    %v377 = vmul.f32 %v374, 0.001953125
    %v378 = vmul.f32 %v376, %v376
    %v379 = vsub.f32 %v377, %v378
    %v380 = vld [vmem:[%s3] sm:$0x1]
    %v381 = vadd.f32 %v379, 1e-05
    %v382 = vrsqrt.pop %v381
    %v383 = vmul.f32 %v382, %v381
    %v384 = vmul.f32 %v383, %v382
    %v385 = vmul.f32 0.5, %v384
    %v386 = vsub.f32 1.5, %v385
    %v387 = vmul.f32 %v382, %v386
    %vm388 = vweird.f32 %v381
    %vm389 = vweird.f32 %v382
    %vm390 = vmor %vm388, %vm389
    %v391 = vsel %vm390, %v382, %v387
    %v392 = vmul.f32 %v380, %v391
    %v393 = vld [vmem:[%s4] sm:$0x1]
    %v394 = vmul.f32 %v376, %v392
    %v395 = vsub.f32 %v393, %v394
    %vm396 = vcmask 64512
    %v398 = vsel %vm396, %v392, 0
    %400 = vmatpush.msra.mxu0 0.0
    %401 = vmatpush.msra.mxu0 0.0
    %402 = vmatpush.msra.mxu0 0.0
    %403 = vmatpush.msra.mxu0 0.0
    %404 = vmatpush.msra.mxu0 0.0
    %405 = vmatpush.msra.mxu0 0.0
    %406 = vmatpush.msra.mxu0 0.0
    %407 = vmatpush.msra.mxu0 0.0
    %408 = vmatpush.msra.mxu0 0.0
    %409 = vmatpush.msra.mxu0 0.0
    %410 = vmatpush.msra.mxu0 0.0
    %411 = vmatpush.msra.mxu0 0.0
    %412 = vmatpush.msra.mxu0 0.0
    %413 = vmatpush.msra.mxu0 0.0
    %414 = vmatpush.msra.mxu0 0.0
    %415 = vmatpush.msra.mxu0 %v84
    %416 = vmatmul.f32.gmra.mxu0 %v398
    %v417 = vpop.f32.mrf.mxu0
    %v418 = vadd.f32 0.0, %v417
    %419 = vdwg.mxu0
    %v421 = vsel %vm396, %v395, 0
    %423 = vmatpush.msra.mxu0 0.0
    %424 = vmatpush.msra.mxu0 0.0
    %425 = vmatpush.msra.mxu0 0.0
    %426 = vmatpush.msra.mxu0 0.0
    %427 = vmatpush.msra.mxu0 0.0
    %428 = vmatpush.msra.mxu0 0.0
    %429 = vmatpush.msra.mxu0 0.0
    %430 = vmatpush.msra.mxu0 0.0
    %431 = vmatpush.msra.mxu0 0.0
    %432 = vmatpush.msra.mxu0 0.0
    %433 = vmatpush.msra.mxu0 0.0
    %434 = vmatpush.msra.mxu0 0.0
    %435 = vmatpush.msra.mxu0 0.0
    %436 = vmatpush.msra.mxu0 0.0
    %437 = vmatpush.msra.mxu0 0.0
    %438 = vmatpush.msra.mxu0 %v84
    %439 = vmatmul.f32.gmra.mxu0 %v421
    %v440 = vpop.f32.mrf.mxu0
    %v441 = vadd.f32 0.0, %v440
    %442 = vdwg.mxu0
    %v443 = vperm.slane %v418, 0
    %v444 = vmul.f32 %v273, %v443
    %v445 = vmul.f32 %v274, %v443
    %v446 = vmul.f32 %v275, %v443
    %v447 = vmul.f32 %v276, %v443
    %v448 = vmul.f32 %v277, %v443
    %v449 = vperm.slane %v441, 0
    %v450 = vadd.f32 %v444, %v449
    %v451 = vadd.f32 %v445, %v449
    %v452 = vadd.f32 %v446, %v449
    %v453 = vadd.f32 %v447, %v449
    %v454 = vadd.f32 %v448, %v449
    %v455 = vmax.f32 %v450, 0.0
    %v456 = vmax.f32 %v451, 0.0
    %v457 = vmax.f32 %v452, 0.0
    %v458 = vmax.f32 %v453, 0.0
    %v459 = vmax.f32 %v454, 0.0
    %v460 = vmul.f32 %v455, %v281
    %v461 = vmul.f32 %v456, %v286
    %v462 = vmul.f32 %v457, %v291
    %v463 = vmul.f32 %v458, %v296
    %v464 = vmul.f32 %v459, %v301
    %465 = vst [vmem:[#allocation2] sm:$0x1] 0.0
    %466 = vst [vmem:[#allocation2 + $0x23] sm:$0x1] 0.0
    %467 = vst [vmem:[#allocation2 + $0x1] sm:$0xff] %v460
    %468 = vst [vmem:[#allocation2 + $0x9] sm:$0xff] %v461
    %469 = vst [vmem:[#allocation2 + $0x11] sm:$0xff] %v462
    %470 = vst [vmem:[#allocation2 + $0x19] sm:$0xff] %v463
    %471 = vst [vmem:[#allocation2 + $0x21] sm:$0x3] %v464
    %v472 = vld [vmem:[#allocation2] sm:$0xff]
    %v473 = vld [vmem:[#allocation2 + $0x8] sm:$0xff]
    %v474 = vld [vmem:[#allocation2 + $0x10] sm:$0xff]
    %v475 = vld [vmem:[#allocation2 + $0x18] sm:$0xff]
    %v476 = vld [vmem:[#allocation2 + $0x20] sm:$0x3]
    %v477 = vld [vmem:[#allocation6] sm:$0xff]
    %v478 = vld [vmem:[#allocation6 + $0x8] sm:$0xff]
    %v479 = vld [vmem:[#allocation6 + $0x10] sm:$0xff]
    %v480 = vld [vmem:[#allocation6 + $0x18] sm:$0xff]
    %v481 = vld [vmem:[#allocation6 + $0x20] sm:$0xff]
    %v482 = vld [vmem:[#allocation6 + $0x28] sm:$0xff]
    %v483 = vld [vmem:[#allocation6 + $0x30] sm:$0xff]
    %v484 = vld [vmem:[#allocation6 + $0x38] sm:$0xff]
    %v485 = vld [vmem:[#allocation6 + $0x40] sm:$0xff]
    %v486 = vld [vmem:[#allocation6 + $0x48] sm:$0xff]
    %v487 = vld [vmem:[#allocation6 + $0x50] sm:$0xff]
    %v488 = vld [vmem:[#allocation6 + $0x58] sm:$0xff]
    %v489 = vld [vmem:[#allocation6 + $0x60] sm:$0xff]
    %v490 = vld [vmem:[#allocation6 + $0x68] sm:$0xff]
    %v491 = vld [vmem:[#allocation6 + $0x70] sm:$0xff]
    %v492 = vld [vmem:[#allocation6 + $0x78] sm:$0xff]
    %v493 = vld [vmem:[#allocation2 + $0x1] sm:$0xff]
    %v494 = vld [vmem:[#allocation2 + $0x9] sm:$0xff]
    %v495 = vld [vmem:[#allocation2 + $0x11] sm:$0xff]
    %v496 = vld [vmem:[#allocation2 + $0x19] sm:$0xff]
    %v497 = vld [vmem:[#allocation2 + $0x21] sm:$0x3]
    %s498 = scalar_lea.vmem [#allocation6], 128
    %v499 = vld [vmem:[%s498] sm:$0xff]
    %v500 = vld [vmem:[%s498 + $0x8] sm:$0xff]
    %v501 = vld [vmem:[%s498 + $0x10] sm:$0xff]
    %v502 = vld [vmem:[%s498 + $0x18] sm:$0xff]
    %v503 = vld [vmem:[%s498 + $0x20] sm:$0xff]
    %v504 = vld [vmem:[%s498 + $0x28] sm:$0xff]
    %v505 = vld [vmem:[%s498 + $0x30] sm:$0xff]
    %v506 = vld [vmem:[%s498 + $0x38] sm:$0xff]
    %v507 = vld [vmem:[%s498 + $0x40] sm:$0xff]
    %v508 = vld [vmem:[%s498 + $0x48] sm:$0xff]
    %v509 = vld [vmem:[%s498 + $0x50] sm:$0xff]
    %v510 = vld [vmem:[%s498 + $0x58] sm:$0xff]
    %v511 = vld [vmem:[%s498 + $0x60] sm:$0xff]
    %v512 = vld [vmem:[%s498 + $0x68] sm:$0xff]
    %v513 = vld [vmem:[%s498 + $0x70] sm:$0xff]
    %v514 = vld [vmem:[%s498 + $0x78] sm:$0xff]
    %515 = vmatpush.msra.mxu0 %v514
    %516 = vmatpush.msra.mxu0 %v513
    %517 = vmatpush.msra.mxu0 %v512
    %518 = vmatpush.msra.mxu0 %v511
    %519 = vmatpush.msra.mxu0 %v510
    %520 = vmatpush.msra.mxu0 %v509
    %521 = vmatpush.msra.mxu0 %v508
    %522 = vmatpush.msra.mxu0 %v507
    %523 = vmatpush.msra.mxu0 %v506
    %524 = vmatpush.msra.mxu0 %v505
    %525 = vmatpush.msra.mxu0 %v504
    %526 = vmatpush.msra.mxu0 %v503
    %527 = vmatpush.msra.mxu0 %v502
    %528 = vmatpush.msra.mxu0 %v501
    %529 = vmatpush.msra.mxu0 %v500
    %530 = vmatpush.msra.mxu0 %v499
    %531 = vmatmul.f32.gmra.mxu0 %v493
    %v532 = vpop.f32.mrf.mxu0
    %v533 = vadd.f32 0.0, %v532
    %534 = vmatmul.f32.gmra.mxu0 %v494
    %v535 = vpop.f32.mrf.mxu0
    %v536 = vadd.f32 0.0, %v535
    %537 = vmatmul.f32.gmra.mxu0 %v495
    %v538 = vpop.f32.mrf.mxu0
    %v539 = vadd.f32 0.0, %v538
    %540 = vmatmul.f32.gmra.mxu0 %v496
    %v541 = vpop.f32.mrf.mxu0
    %v542 = vadd.f32 0.0, %v541
    %543 = vmatmul.f32.gmra.mxu0 %v497
    %v544 = vpop.f32.mrf.mxu0
    %v545 = vadd.f32 0.0, %v544
    %546 = vdwg.mxu0
    %547 = vmatpush.msra.mxu0 %v492
    %548 = vmatpush.msra.mxu0 %v491
    %549 = vmatpush.msra.mxu0 %v490
    %550 = vmatpush.msra.mxu0 %v489
    %551 = vmatpush.msra.mxu0 %v488
    %552 = vmatpush.msra.mxu0 %v487
    %553 = vmatpush.msra.mxu0 %v486
    %554 = vmatpush.msra.mxu0 %v485
    %555 = vmatpush.msra.mxu0 %v484
    %556 = vmatpush.msra.mxu0 %v483
    %557 = vmatpush.msra.mxu0 %v482
    %558 = vmatpush.msra.mxu0 %v481
    %559 = vmatpush.msra.mxu0 %v480
    %560 = vmatpush.msra.mxu0 %v479
    %561 = vmatpush.msra.mxu0 %v478
    %562 = vmatpush.msra.mxu0 %v477
    %563 = vmatmul.f32.gmra.mxu0 %v472
    %v564 = vpop.f32.mrf.mxu0
    %v565 = vadd.f32 %v533, %v564
    %566 = vmatmul.f32.gmra.mxu0 %v473
    %v567 = vpop.f32.mrf.mxu0
    %v568 = vadd.f32 %v536, %v567
    %569 = vmatmul.f32.gmra.mxu0 %v474
    %v570 = vpop.f32.mrf.mxu0
    %v571 = vadd.f32 %v539, %v570
    %572 = vmatmul.f32.gmra.mxu0 %v475
    %v573 = vpop.f32.mrf.mxu0
    %v574 = vadd.f32 %v542, %v573
    %575 = vmatmul.f32.gmra.mxu0 %v476
    %v576 = vpop.f32.mrf.mxu0
    %v577 = vadd.f32 %v545, %v576
    %578 = vdwg.mxu0
    %v579 = vld [vmem:[#allocation2 + $0x2] sm:$0xff]
    %v580 = vld [vmem:[#allocation2 + $0xa] sm:$0xff]
    %v581 = vld [vmem:[#allocation2 + $0x12] sm:$0xff]
    %v582 = vld [vmem:[#allocation2 + $0x1a] sm:$0xff]
    %v583 = vld [vmem:[#allocation2 + $0x22] sm:$0x3]
    %s584 = scalar_lea.vmem [#allocation6], 256
    %v585 = vld [vmem:[%s584] sm:$0xff]
    %v586 = vld [vmem:[%s584 + $0x8] sm:$0xff]
    %v587 = vld [vmem:[%s584 + $0x10] sm:$0xff]
    %v588 = vld [vmem:[%s584 + $0x18] sm:$0xff]
    %v589 = vld [vmem:[%s584 + $0x20] sm:$0xff]
    %v590 = vld [vmem:[%s584 + $0x28] sm:$0xff]
    %v591 = vld [vmem:[%s584 + $0x30] sm:$0xff]
    %v592 = vld [vmem:[%s584 + $0x38] sm:$0xff]
    %v593 = vld [vmem:[%s584 + $0x40] sm:$0xff]
    %v594 = vld [vmem:[%s584 + $0x48] sm:$0xff]
    %v595 = vld [vmem:[%s584 + $0x50] sm:$0xff]
    %v596 = vld [vmem:[%s584 + $0x58] sm:$0xff]
    %v597 = vld [vmem:[%s584 + $0x60] sm:$0xff]
    %v598 = vld [vmem:[%s584 + $0x68] sm:$0xff]
    %v599 = vld [vmem:[%s584 + $0x70] sm:$0xff]
    %v600 = vld [vmem:[%s584 + $0x78] sm:$0xff]
    %601 = vmatpush.msra.mxu0 %v600
    %602 = vmatpush.msra.mxu0 %v599
    %603 = vmatpush.msra.mxu0 %v598
    %604 = vmatpush.msra.mxu0 %v597
    %605 = vmatpush.msra.mxu0 %v596
    %606 = vmatpush.msra.mxu0 %v595
    %607 = vmatpush.msra.mxu0 %v594
    %608 = vmatpush.msra.mxu0 %v593
    %609 = vmatpush.msra.mxu0 %v592
    %610 = vmatpush.msra.mxu0 %v591
    %611 = vmatpush.msra.mxu0 %v590
    %612 = vmatpush.msra.mxu0 %v589
    %613 = vmatpush.msra.mxu0 %v588
    %614 = vmatpush.msra.mxu0 %v587
    %615 = vmatpush.msra.mxu0 %v586
    %616 = vmatpush.msra.mxu0 %v585
    %617 = vmatmul.f32.gmra.mxu0 %v579
    %v618 = vpop.f32.mrf.mxu0
    %v619 = vadd.f32 0.0, %v618
    %620 = vmatmul.f32.gmra.mxu0 %v580
    %v621 = vpop.f32.mrf.mxu0
    %v622 = vadd.f32 0.0, %v621
    %623 = vmatmul.f32.gmra.mxu0 %v581
    %v624 = vpop.f32.mrf.mxu0
    %v625 = vadd.f32 0.0, %v624
    %626 = vmatmul.f32.gmra.mxu0 %v582
    %v627 = vpop.f32.mrf.mxu0
    %v628 = vadd.f32 0.0, %v627
    %629 = vmatmul.f32.gmra.mxu0 %v583
    %v630 = vpop.f32.mrf.mxu0
    %v631 = vadd.f32 0.0, %v630
    %632 = vdwg.mxu0
    %v633 = vadd.f32 %v565, %v619
    %v634 = vadd.f32 %v568, %v622
    %v635 = vadd.f32 %v571, %v625
    %v636 = vadd.f32 %v574, %v628
    %v637 = vadd.f32 %v577, %v631
    %v638 = vmul.f32 %v633, %v281
    %v639 = vmul.f32 %v634, %v286
    %v640 = vmul.f32 %v635, %v291
    %v641 = vmul.f32 %v636, %v296
    %v642 = vmul.f32 %v637, %v301
    %v643 = vadd.f32 %v638, %v639
    %v644 = vadd.f32 %v643, %v640
    %v645 = vadd.f32 %v644, %v641
    %v646 = vsel %vm311, %v642, 0.0
    %v647 = vadd.f32 %v645, %v646
    %v648 = vrot.slane %v647, 4
    %v649 = vadd.f32 %v647, %v648
    %v650 = vrot.slane %v649, 2
    %v651 = vadd.f32 %v649, %v650
    %v652 = vrot.slane %v651, 1
    %v653 = vadd.f32 %v651, %v652
    %v654 = vmul.f32 %v638, %v638
    %v655 = vmul.f32 %v639, %v639
    %v656 = vmul.f32 %v640, %v640
    %v657 = vmul.f32 %v641, %v641
    %v658 = vmul.f32 %v642, %v642
    %v659 = vadd.f32 %v654, %v655
    %v660 = vadd.f32 %v659, %v656
    %v661 = vadd.f32 %v660, %v657
    %v662 = vsel %vm311, %v658, 0.0
    %v663 = vadd.f32 %v661, %v662
    %v664 = vrot.slane %v663, 4
    %v665 = vadd.f32 %v663, %v664
    %v666 = vrot.slane %v665, 2
    %v667 = vadd.f32 %v665, %v666
    %v668 = vrot.slane %v667, 1
    %v669 = vadd.f32 %v667, %v668
    %670 = vmatpush.msra.mxu0 %v83
    %671 = vmatpush.msra.mxu0 %v82
    %672 = vmatpush.msra.mxu0 %v81
    %673 = vmatpush.msra.mxu0 %v80
    %674 = vmatpush.msra.mxu0 %v79
    %675 = vmatpush.msra.mxu0 %v78
    %676 = vmatpush.msra.mxu0 %v77
    %677 = vmatpush.msra.mxu0 %v76
    %678 = vmatpush.msra.mxu0 %v75
    %679 = vmatpush.msra.mxu0 %v74
    %680 = vmatpush.msra.mxu0 %v73
    %681 = vmatpush.msra.mxu0 %v72
    %682 = vmatpush.msra.mxu0 %v71
    %683 = vmatpush.msra.mxu0 %v70
    %684 = vmatpush.msra.mxu0 %v69
    %685 = vmatpush.msra.mxu0 %v68
    %686 = vmatmul.f32.gmra.mxu0 %v653
    %v687 = vpop.f32.mrf.mxu0
    %v688 = vadd.f32 0.0, %v687
    %689 = vdwg.mxu0
    %690 = vmatpush.msra.mxu0 %v83
    %691 = vmatpush.msra.mxu0 %v82
    %692 = vmatpush.msra.mxu0 %v81
    %693 = vmatpush.msra.mxu0 %v80
    %694 = vmatpush.msra.mxu0 %v79
    %695 = vmatpush.msra.mxu0 %v78
    %696 = vmatpush.msra.mxu0 %v77
    %697 = vmatpush.msra.mxu0 %v76
    %698 = vmatpush.msra.mxu0 %v75
    %699 = vmatpush.msra.mxu0 %v74
    %700 = vmatpush.msra.mxu0 %v73
    %701 = vmatpush.msra.mxu0 %v72
    %702 = vmatpush.msra.mxu0 %v71
    %703 = vmatpush.msra.mxu0 %v70
    %704 = vmatpush.msra.mxu0 %v69
    %705 = vmatpush.msra.mxu0 %v68
    %706 = vmatmul.f32.gmra.mxu0 %v669
    %v707 = vpop.f32.mrf.mxu0
    %v708 = vadd.f32 0.0, %v707
    %709 = vdwg.mxu0
    %v710 = vmul.f32 %v688, 0.001953125
    %v711 = vmul.f32 %v708, 0.001953125
    %v712 = vmul.f32 %v710, %v710
    %v713 = vsub.f32 %v711, %v712
    %v714 = vld [vmem:[%s5] sm:$0x1]
    %v715 = vadd.f32 %v713, 1e-05
    %v716 = vrsqrt.pop %v715
    %v717 = vmul.f32 %v716, %v715
    %v718 = vmul.f32 %v717, %v716
    %v719 = vmul.f32 0.5, %v718
    %v720 = vsub.f32 1.5, %v719
    %v721 = vmul.f32 %v716, %v720
    %vm722 = vweird.f32 %v715
    %vm723 = vweird.f32 %v716
    %vm724 = vmor %vm722, %vm723
    %v725 = vsel %vm724, %v716, %v721
    %v726 = vmul.f32 %v714, %v725
    %v727 = vld [vmem:[%s6] sm:$0x1]
    %v728 = vmul.f32 %v710, %v726
    %v729 = vsub.f32 %v727, %v728
    %v731 = vsel %vm396, %v726, 0
    %733 = vmatpush.msra.mxu0 0.0
    %734 = vmatpush.msra.mxu0 0.0
    %735 = vmatpush.msra.mxu0 0.0
    %736 = vmatpush.msra.mxu0 0.0
    %737 = vmatpush.msra.mxu0 0.0
    %738 = vmatpush.msra.mxu0 0.0
    %739 = vmatpush.msra.mxu0 0.0
    %740 = vmatpush.msra.mxu0 0.0
    %741 = vmatpush.msra.mxu0 0.0
    %742 = vmatpush.msra.mxu0 0.0
    %743 = vmatpush.msra.mxu0 0.0
    %744 = vmatpush.msra.mxu0 0.0
    %745 = vmatpush.msra.mxu0 0.0
    %746 = vmatpush.msra.mxu0 0.0
    %747 = vmatpush.msra.mxu0 0.0
    %748 = vmatpush.msra.mxu0 %v84
    %749 = vmatmul.f32.gmra.mxu0 %v731
    %v750 = vpop.f32.mrf.mxu0
    %v751 = vadd.f32 0.0, %v750
    %752 = vdwg.mxu0
    %v754 = vsel %vm396, %v729, 0
    %756 = vmatpush.msra.mxu0 0.0
    %757 = vmatpush.msra.mxu0 0.0
    %758 = vmatpush.msra.mxu0 0.0
    %759 = vmatpush.msra.mxu0 0.0
    %760 = vmatpush.msra.mxu0 0.0
    %761 = vmatpush.msra.mxu0 0.0
    %762 = vmatpush.msra.mxu0 0.0
    %763 = vmatpush.msra.mxu0 0.0
    %764 = vmatpush.msra.mxu0 0.0
    %765 = vmatpush.msra.mxu0 0.0
    %766 = vmatpush.msra.mxu0 0.0
    %767 = vmatpush.msra.mxu0 0.0
    %768 = vmatpush.msra.mxu0 0.0
    %769 = vmatpush.msra.mxu0 0.0
    %770 = vmatpush.msra.mxu0 0.0
    %771 = vmatpush.msra.mxu0 %v84
    %772 = vmatmul.f32.gmra.mxu0 %v754
    %v773 = vpop.f32.mrf.mxu0
    %v774 = vadd.f32 0.0, %v773
    %775 = vdwg.mxu0
    %v776 = vperm.slane %v751, 0
    %v777 = vmul.f32 %v633, %v776
    %v778 = vmul.f32 %v634, %v776
    %v779 = vmul.f32 %v635, %v776
    %v780 = vmul.f32 %v636, %v776
    %v781 = vmul.f32 %v637, %v776
    %v782 = vperm.slane %v774, 0
    %v783 = vadd.f32 %v777, %v782
    %v784 = vadd.f32 %v778, %v782
    %v785 = vadd.f32 %v779, %v782
    %v786 = vadd.f32 %v780, %v782
    %v787 = vadd.f32 %v781, %v782
    %v788 = vmax.f32 %v783, 0.0
    %v789 = vmax.f32 %v784, 0.0
    %v790 = vmax.f32 %v785, 0.0
    %v791 = vmax.f32 %v786, 0.0
    %v792 = vmax.f32 %v787, 0.0
    %v793 = vmul.f32 %v788, %v281
    %v794 = vmul.f32 %v789, %v286
    %v795 = vmul.f32 %v790, %v291
    %v796 = vmul.f32 %v791, %v296
    %v797 = vmul.f32 %v792, %v301
    %798 = vst [vmem:[#allocation8] sm:$0xff] %v793
    %799 = vst [vmem:[#allocation8 + $0x8] sm:$0xff] %v794
    %800 = vst [vmem:[#allocation8 + $0x10] sm:$0xff] %v795
    %801 = vst [vmem:[#allocation8 + $0x18] sm:$0xff] %v796
    %802 = vst [vmem:[#allocation8 + $0x20] sm:$0x3] %v797
    // Predicated region
    $region50: #{tpu_custom_call.1} parent=1 // pred_check
      _
    $region51: #{tpu_custom_call.1} parent=1 // pred_check_branch
      %804 = sbr.rel (0) target = $region53
    $region52: #{tpu_custom_call.1} parent=1 // pred_region
      %806 = vsyncadd [#allocation5], 0
      %s807 = sshll.u32 [#allocation8], 4
      %s808 = int_to_ptr.vmem [resolvable:$true] %s807
      %s809 = sshll.u32 %s10, 4
      %s810 = int_to_ptr.hbm [resolvable:$true] %s809
      %815 = dma.vmem_to_hbm [thread:$0]  %s808, 640, %s810, [#allocation5], 128, 128, 8
    $region53: #{tpu_custom_call.1} parent=1 // pred_fallthru
      _
    // Predicated region
    $region54: #{tpu_custom_call.1} parent=1 // pred_check
      _
    $region55: #{tpu_custom_call.1} parent=1 // pred_check_branch
      %817 = sbr.rel (0) target = $region57
    $region56: #{tpu_custom_call.1} parent=1 // pred_region
      %819 = dma.done [#allocation5], 640
    $region57: #{tpu_custom_call.1} parent=1 // pred_fallthru
      _
    %820 = vsyncpa [#allocation4], 1
    %821 = vsyncpa [#allocation7], 1
    %822 = vsyncpa [#allocation5], 1

</llo_original>
